<compile_context>
chip_gen: v6e
topology: v6e:2x2x1
jax: 0.10.0
libtpu: 0.0.40
codegen_flags: <defaults>
</compile_context>

<pallas_src>
import jax
import jax.numpy as jnp
from jax.experimental import pallas as pl
from jax.experimental.pallas import tpu as pltpu


# ----------------------------- helpers --------------------------------------


def _round_up(x, m):
    return (x + m - 1) // m * m


def _cdiv(a, b):
    return -(-a // b)


def _vmem_capacity_bytes():
    """Physical VMEM per TensorCore; conservative fallback if query fails."""
    try:
        cap = int(pltpu.get_tpu_info().vmem_capacity_bytes)
        if cap > 0:
            return cap
    except Exception:
        pass
    return 64 << 20  # v7x has the smallest VMEM of current gens -> safe default


def _feature_pad(n):
    # Lane-dense padding.  Prefer 256 granules (v6e/v7x MXU is 2x256x256) when
    # the extra padding is <10%, else 128 (fine for v5e's 4x128x128 MXU).
    p128, p256 = _round_up(n, 128), _round_up(n, 256)
    return p256 if p256 <= 1.1 * p128 else p128


def _weights_resident_bytes(d_model_p, d_ff_p):
    # bf16 W1 + W2 and f32 biases; assume Pallas double-buffers each block.
    return 2 * (2 * d_model_p * d_ff_p * 2 + d_ff_p * 4 + d_model_p * 4)


def _choose_tkf(d_ff_p, target=512):
    """Largest <=target, 128-granular d_ff tile that divides d_ff_p exactly."""
    nk = _cdiv(d_ff_p, target)
    while d_ff_p % nk or (d_ff_p // nk) % 128:
        nk += 1
    return d_ff_p // nk


# ------------------------ one-time parameter prep ----------------------------


def prepare_ffn_params(w1, b1, w2, b2, *, tkf_target=512):
    """Pad + cast the FFN parameters ONCE (hoisted out of the forward path).

    w1: (d_model, d_ff), b1: (d_ff,), w2: (d_ff, d_model), b2: (d_model,).
    Returns (w1_p, b1_p, w2_p, b2_p): bf16 weights / f32 biases, padded to
    lane-dense shapes chosen to match the runtime tiling.
    """
    d_model, d_ff = w1.shape
    d_model_p = _feature_pad(d_model)
    d_ff_p = _round_up(d_ff, 128)

    vmem_cap = _vmem_capacity_bytes()
    if _weights_resident_bytes(d_model_p, d_ff_p) > int(0.45 * vmem_cap):
        # Weights will be streamed over d_ff: pad so an ~tkf_target-sized,
        # 128-granular tile divides d_ff_p exactly (no huge ragged-step waste).
        nk = _cdiv(d_ff_p, tkf_target)
        d_ff_p = nk * _round_up(_cdiv(d_ff, nk), 128)

    w1_p = jnp.pad(w1, ((0, d_model_p - d_model),
                        (0, d_ff_p - d_ff))).astype(jnp.bfloat16)
    w2_p = jnp.pad(w2, ((0, d_ff_p - d_ff),
                        (0, d_model_p - d_model))).astype(jnp.bfloat16)
    b1_p = jnp.pad(b1, (0, d_ff_p - d_ff)).reshape(1, d_ff_p).astype(jnp.float32)
    b2_p = jnp.pad(b2, (0, d_model_p - d_model)).reshape(
        1, d_model_p).astype(jnp.float32)
    return w1_p, b1_p, w2_p, b2_p


# -------------------------------- kernels ------------------------------------


def _ffn_resident_kernel(x_ref, w1_ref, b1_ref, w2_ref, b2_ref, o_ref):
    # Weights fully resident in VMEM; 1-D grid over row tiles.
    x = x_ref[...]
    if x.dtype != jnp.bfloat16:
        x = x.astype(jnp.bfloat16)
    h = jnp.dot(x, w1_ref[...], preferred_element_type=jnp.float32)
    h = jnp.maximum(h + b1_ref[...], 0.0)
    o_ref[...] = (jnp.dot(h.astype(w2_ref.dtype), w2_ref[...],
                          preferred_element_type=jnp.float32)
                  + b2_ref[...]).astype(o_ref.dtype)


def _ffn_stream_kernel(x_ref, w1_ref, b1_ref, w2_ref, b2_ref, o_ref):
    # d_ff is tiled along grid axis 1; accumulate into the (f32) output block,
    # which stays resident across k because its block index is constant in k.
    k = pl.program_id(1)
    x = x_ref[...]
    if x.dtype != jnp.bfloat16:
        x = x.astype(jnp.bfloat16)
    h = jnp.dot(x, w1_ref[...], preferred_element_type=jnp.float32)
    h = jnp.maximum(h + b1_ref[...], 0.0)
    partial = jnp.dot(h.astype(w2_ref.dtype), w2_ref[...],
                      preferred_element_type=jnp.float32)

    @pl.when(k == 0)
    def _():
        o_ref[...] = partial + b2_ref[...]

    @pl.when(k != 0)
    def _():
        o_ref[...] += partial


# ------------------------------- wrapper -------------------------------------


@jax.jit
def poswise_ffn(x, w1_p, b1_p, w2_p, b2_p):
    """x: (batch, seq, d_model); padded/bf16 params from prepare_ffn_params."""
    batch, seq, d_model = x.shape
    d_model_p, d_ff_p = w1_p.shape
    m = batch * seq
    out_dtype = x.dtype

    vmem_cap = _vmem_capacity_bytes()
    budget = int(0.70 * vmem_cap)
    big_vmem = vmem_cap >= (100 << 20)          # v5e / v6e (128 MiB) vs v7x (64 MiB)

    # x is only padded/cast in the wrapper when the feature dim needs padding;
    # otherwise it is passed through and cast to bf16 per-tile in the kernel.
    wrapper_cast = (d_model_p != d_model) and x.dtype != jnp.bfloat16
    x_in_bytes = 2 if wrapper_cast else x.dtype.itemsize

    def row_bytes(tm, d_ff_slice, out_bytes):
        return (2 * tm * d_model_p * x_in_bytes     # x tiles (double-buffered)
                + 2 * tm * d_model_p * out_bytes    # out tiles (double-buffered)
                + tm * d_ff_slice * 4               # h intermediate (f32)
                + tm * d_model_p * 4)               # fc2 partial (f32)

    m_cap = _round_up(max(m, 1), 8)

    # --- plan: weights-resident fast path first ------------------------------
    mode, tm, tkf, est_bytes = None, None, None, None
    w_res = _weights_resident_bytes(d_model_p, d_ff_p)
    for cand in (512, 256, 128, 64, 32, 16, 8):
        cand = min(cand, m_cap)
        need = w_res + row_bytes(cand, d_ff_p, out_dtype.itemsize)
        if need <= budget:
            mode, tm, tkf, est_bytes = "resident", cand, d_ff_p, need
            break

    # --- plan: streaming path (large d_ff) ------------------------------------
    if mode is None:
        tkf = _choose_tkf(d_ff_p, target=512)
        w_stream = 2 * (2 * d_model_p * tkf * 2 + tkf * 4 + d_model_p * 4)
        tm_prefs = (1024, 768, 512, 384, 256, 128, 64, 32, 16, 8) if big_vmem \
            else (512, 384, 256, 128, 64, 32, 16, 8)
        for cand in tm_prefs:
            cand = min(cand, m_cap)
            need = w_stream + row_bytes(cand, tkf, 4)
            if need <= budget:
                mode, tm, est_bytes = "stream", cand, need
                break
        if mode is None:  # pathological fallback
            tm = min(8, m_cap)
            mode, est_bytes = "stream", w_stream + row_bytes(tm, tkf, 4)

    # --- pad x rows / features as needed --------------------------------------
    m_p = _round_up(m, tm)
    x2d = x.reshape(m, d_model)
    if m_p != m or d_model_p != d_model:
        x2d = jnp.pad(x2d, ((0, m_p - m), (0, d_model_p - d_model)))
    if wrapper_cast:
        x2d = x2d.astype(jnp.bfloat16)

    vmem_limit = min(int(0.9 * vmem_cap), max(32 << 20, int(1.25 * est_bytes)))
    cost = pl.CostEstimate(
        flops=4 * m_p * d_model_p * d_ff_p,
        transcendentals=0,
        bytes_accessed=int(x2d.size * x2d.dtype.itemsize
                           + w1_p.size * 2 + w2_p.size * 2
                           + b1_p.size * 4 + b2_p.size * 4
                           + m_p * d_model_p * out_dtype.itemsize),
    )

    if mode == "resident":
        out_p = pl.pallas_call(
            _ffn_resident_kernel,
            out_shape=jax.ShapeDtypeStruct((m_p, d_model_p), out_dtype),
            grid_spec=pltpu.PrefetchScalarGridSpec(
                num_scalar_prefetch=0,
                grid=(m_p // tm,),
                in_specs=[
                    pl.BlockSpec((tm, d_model_p), lambda i: (i, 0)),      # x rows
                    pl.BlockSpec((d_model_p, d_ff_p), lambda i: (0, 0)),  # W1 (resident)
                    pl.BlockSpec((1, d_ff_p), lambda i: (0, 0)),          # b1
                    pl.BlockSpec((d_ff_p, d_model_p), lambda i: (0, 0)),  # W2 (resident)
                    pl.BlockSpec((1, d_model_p), lambda i: (0, 0)),       # b2
                ],
                out_specs=pl.BlockSpec((tm, d_model_p), lambda i: (i, 0)),
            ),
            compiler_params=pltpu.CompilerParams(
                dimension_semantics=("parallel",),
                vmem_limit_bytes=int(vmem_limit)),
            cost_estimate=cost,
        )(x2d, w1_p, b1_p, w2_p, b2_p)
    else:
        out_p = pl.pallas_call(
            _ffn_stream_kernel,
            out_shape=jax.ShapeDtypeStruct((m_p, d_model_p), jnp.float32),
            grid_spec=pltpu.PrefetchScalarGridSpec(
                num_scalar_prefetch=0,
                grid=(m_p // tm, d_ff_p // tkf),
                in_specs=[
                    pl.BlockSpec((tm, d_model_p), lambda i, k: (i, 0)),   # x rows
                    pl.BlockSpec((d_model_p, tkf), lambda i, k: (0, k)),  # W1 slice
                    pl.BlockSpec((1, tkf), lambda i, k: (0, k)),          # b1 slice
                    pl.BlockSpec((tkf, d_model_p), lambda i, k: (k, 0)),  # W2 slice
                    pl.BlockSpec((1, d_model_p), lambda i, k: (0, 0)),    # b2
                ],
                out_specs=pl.BlockSpec((tm, d_model_p), lambda i, k: (i, 0)),
            ),
            compiler_params=pltpu.CompilerParams(
                dimension_semantics=("parallel", "arbitrary"),
                vmem_limit_bytes=int(vmem_limit)),
            cost_estimate=cost,
        )(x2d, w1_p, b1_p, w2_p, b2_p)
        if out_p.dtype != out_dtype:
            out_p = out_p.astype(out_dtype)

    return out_p[:m, :d_model].reshape(batch, seq, d_model)


def _reference(x, w1, b1, w2, b2):
    h = jnp.maximum(jnp.dot(x, w1) + b1, 0.0)
    return jnp.dot(h, w2) + b2


if __name__ == "__main__":
    # Small shapes consistent with the module's forward.
    batch, seq, d_model, d_ff = 2, 8, 32, 64

    key = jax.random.PRNGKey(0)
    kx, kw1, kb1, kw2, kb2 = jax.random.split(key, 5)

    x = jax.random.normal(kx, (batch, seq, d_model), dtype=jnp.float32)

    # Deterministic parameter init (PyTorch Linear-style uniform bounds).
    bound1 = 1.0 / jnp.sqrt(d_model)
    bound2 = 1.0 / jnp.sqrt(d_ff)
    w1 = jax.random.uniform(kw1, (d_model, d_ff), jnp.float32, -bound1, bound1)
    b1 = jax.random.uniform(kb1, (d_ff,), jnp.float32, -bound1, bound1)
    w2 = jax.random.uniform(kw2, (d_ff, d_model), jnp.float32, -bound2, bound2)
    b2 = jax.random.uniform(kb2, (d_model,), jnp.float32, -bound2, bound2)

    # Weight pad + bf16 cast done ONCE, outside the forward hot path.
    params = prepare_ffn_params(w1, b1, w2, b2)

    out = poswise_ffn(x, *params)
    out = jax.block_until_ready(out)

    ref = _reference(x, w1, b1, w2, b2)
    assert out.shape == (batch, seq, d_model)
    # bf16 MXU inputs with f32 accumulation -> slightly looser tolerance
    # (intentional precision change vs. the pure-f32 PyTorch module).
    assert jnp.allclose(out, ref, atol=3e-2, rtol=3e-2), "mismatch vs reference"

    print("KERNEL_OK")
</pallas_src>

<mosaic_0001>
module attributes {stable_mosaic.version = 11 : i64} {
  func.func @_ffn_resident_kernel(%arg0: i32, %arg1: memref<16x128xbf16, #tpu.memory_space<vmem>>, %arg2: memref<128x128xbf16, #tpu.memory_space<vmem>>, %arg3: memref<1x128xf32, #tpu.memory_space<vmem>>, %arg4: memref<128x128xbf16, #tpu.memory_space<vmem>>, %arg5: memref<1x128xf32, #tpu.memory_space<vmem>>, %arg6: memref<16x128xf32, #tpu.memory_space<vmem>>) attributes {dimension_semantics = [#tpu.dimension_semantics<parallel>], iteration_bounds = array<i64: 1>, scalar_prefetch = 0 : i64, scratch_operands = 0 : i64, tpu.core_type = #tpu.core_type<tc>, window_params = [{transform_indices = @transform_0, window_bounds = array<i64: 16, 128>}, {pipeline_mode = #tpu.pipeline_mode<synchronous>, transform_indices = @transform_1, window_bounds = array<i64: 128, 128>}, {pipeline_mode = #tpu.pipeline_mode<synchronous>, transform_indices = @transform_2, window_bounds = array<i64: 1, 128>}, {pipeline_mode = #tpu.pipeline_mode<synchronous>, transform_indices = @transform_3, window_bounds = array<i64: 128, 128>}, {pipeline_mode = #tpu.pipeline_mode<synchronous>, transform_indices = @transform_4, window_bounds = array<i64: 1, 128>}, {transform_indices = @transform_5, window_bounds = array<i64: 16, 128>}]} {
    %c0 = arith.constant 0 : index
    %c0_0 = arith.constant 0 : index
    %0 = vector.load %arg1[%c0, %c0_0] : memref<16x128xbf16, #tpu.memory_space<vmem>>, vector<16x128xbf16>
    %c0_1 = arith.constant 0 : index
    %c0_2 = arith.constant 0 : index
    %1 = vector.load %arg2[%c0_1, %c0_2] : memref<128x128xbf16, #tpu.memory_space<vmem>>, vector<128x128xbf16>
    %cst = arith.constant dense<0.000000e+00> : vector<16x128xf32>
    %2 = tpu.matmul %0, %1, %cst {dimension_numbers = #tpu.dot_dimension_numbers<[1], [0], [0], [1], [0, 0, 1, 1], [], []>} : vector<16x128xbf16>, vector<128x128xbf16>, vector<16x128xf32> -> vector<16x128xf32>
    %c0_3 = arith.constant 0 : index
    %c0_4 = arith.constant 0 : index
    %3 = vector.load %arg3[%c0_3, %c0_4] : memref<1x128xf32, #tpu.memory_space<vmem>>, vector<1x128xf32>
    %4 = vector.broadcast %3 : vector<1x128xf32> to vector<16x128xf32>
    %5 = arith.addf %2, %4 : vector<16x128xf32>
    %cst_5 = arith.constant 0.000000e+00 : f32
    %6 = vector.broadcast %cst_5 : f32 to vector<16x128xf32>
    %7 = arith.maximumf %5, %6 : vector<16x128xf32>
    %8 = arith.truncf %7 : vector<16x128xf32> to vector<16x128xbf16>
    %c0_6 = arith.constant 0 : index
    %c0_7 = arith.constant 0 : index
    %9 = vector.load %arg4[%c0_6, %c0_7] : memref<128x128xbf16, #tpu.memory_space<vmem>>, vector<128x128xbf16>
    %cst_8 = arith.constant dense<0.000000e+00> : vector<16x128xf32>
    %10 = tpu.matmul %8, %9, %cst_8 {dimension_numbers = #tpu.dot_dimension_numbers<[1], [0], [0], [1], [0, 0, 1, 1], [], []>} : vector<16x128xbf16>, vector<128x128xbf16>, vector<16x128xf32> -> vector<16x128xf32>
    %c0_9 = arith.constant 0 : index
    %c0_10 = arith.constant 0 : index
    %11 = vector.load %arg5[%c0_9, %c0_10] : memref<1x128xf32, #tpu.memory_space<vmem>>, vector<1x128xf32>
    %12 = vector.broadcast %11 : vector<1x128xf32> to vector<16x128xf32>
    %13 = arith.addf %10, %12 : vector<16x128xf32>
    %c0_11 = arith.constant 0 : index
    %c0_12 = arith.constant 0 : index
    %14 = vector.load %arg6[%c0_11, %c0_12] : memref<16x128xf32, #tpu.memory_space<vmem>>, vector<16x128xf32>
    tpu.vector_store %arg6[%c0_11, %c0_12], %13 {strides = array<i32>} : memref<16x128xf32, #tpu.memory_space<vmem>>, vector<16x128xf32>,
    return
  }
  func.func @transform_0(%arg0: i32) -> (i32, i32) {
    %c0_i32 = arith.constant 0 : i32
    %c0_i32_0 = arith.constant 0 : i32
    return %arg0, %c0_i32 : i32, i32
  }
  func.func @transform_1(%arg0: i32) -> (i32, i32) {
    %c0_i32 = arith.constant 0 : i32
    %c0_i32_0 = arith.constant 0 : i32
    %c0_i32_1 = arith.constant 0 : i32
    return %c0_i32, %c0_i32_0 : i32, i32
  }
  func.func @transform_2(%arg0: i32) -> (i32, i32) {
    %c0_i32 = arith.constant 0 : i32
    %c0_i32_0 = arith.constant 0 : i32
    %c0_i32_1 = arith.constant 0 : i32
    return %c0_i32, %c0_i32_0 : i32, i32
  }
  func.func @transform_3(%arg0: i32) -> (i32, i32) {
    %c0_i32 = arith.constant 0 : i32
    %c0_i32_0 = arith.constant 0 : i32
    %c0_i32_1 = arith.constant 0 : i32
    return %c0_i32, %c0_i32_0 : i32, i32
  }
  func.func @transform_4(%arg0: i32) -> (i32, i32) {
    %c0_i32 = arith.constant 0 : i32
    %c0_i32_0 = arith.constant 0 : i32
    %c0_i32_1 = arith.constant 0 : i32
    return %c0_i32, %c0_i32_0 : i32, i32
  }
  func.func @transform_5(%arg0: i32) -> (i32, i32) {
    %c0_i32 = arith.constant 0 : i32
    %c0_i32_0 = arith.constant 0 : i32
    return %arg0, %c0_i32 : i32, i32
  }
}

</mosaic_0001>

<llo_original>
// kernel: poswise_ffn.1
$region0: #{poswise_ffn.1}
  #allocation0 [shape = 'u32[]', space=smem, size = 0x4, offset = 0x4, fixed_abs, tag = 'smem constant byte address 0x4 - core index']
  #allocation1 [shape = 'u32[144,128]{1,0:T(1,128)}', space=vmem, size = 0x12000, scoped, tag = 'internal scratch']
  %s0 = inlined_call_operand.vmem [shape: bf16[16,128], index: 0, kind: input, shape index: {}]
  %s1 = inlined_call_operand.hbm [shape: bf16[128,128], index: 1, kind: input, shape index: {}]
  %s2 = inlined_call_operand.vmem [shape: f32[1,128], index: 2, kind: input, shape index: {}]
  %s3 = inlined_call_operand.hbm [shape: bf16[128,128], index: 3, kind: input, shape index: {}]
  %s4 = inlined_call_operand.vmem [shape: f32[1,128], index: 4, kind: input, shape index: {}]
  %s5 = inlined_call_operand.vmem [shape: f32[16,128], index: 5, kind: output, shape index: {}]
  %s6 = sld [smem:[#allocation0]]
  $region38: #{poswise_ffn.1} parent=0
    _
  %s8 = ssub.s32 1, %s6
  %s9 = scalar_select 0, %s8, %s6
  $region1: #{poswise_ffn.1} parent=0
    #allocation2 [shape = 'u8[32768]{0}', space=vmem, size = 0x8000, scoped, tag = 'input window, operand 1, single buffered']
    #allocation3 [shape = 's32[1]{0}', space=sflag, size = 0x4, scoped, tag = 'scoped memory for poswise_ffn.1']
    #allocation4 [shape = 'u8[32768]{0}', space=vmem, size = 0x8000, scoped, tag = 'input window, operand 3, single buffered']
    #allocation5 [shape = 's32[1]{0}', space=sflag, size = 0x4, scoped, tag = 'scoped memory for poswise_ffn.1']
    %10 = vsyncpa [#allocation3], 0
    %11 = vsyncpa [#allocation5], 0
    // Predicated region
    $region2: #{poswise_ffn.1} parent=1 // pred_check
      _
    $region3: #{poswise_ffn.1} parent=1 // pred_check_branch
      %13 = sbr.rel (0) target = $region5
    $region4: #{poswise_ffn.1} parent=1 // pred_region
      _
    $region5: #{poswise_ffn.1} parent=1 // pred_fallthru
      _
    // Predicated region
    $region6: #{poswise_ffn.1} parent=1 // pred_check
      _
    $region7: #{poswise_ffn.1} parent=1 // pred_check_branch
      %15 = sbr.rel (0) target = $region9
    $region8: #{poswise_ffn.1} parent=1 // pred_region
      %s17 = ssub.s32 1024, 1024
      %18 = vsyncadd [#allocation3], %s17
      %s19 = sshll.u32 [#allocation2], 4
      %s20 = int_to_ptr.vmem [resolvable:$true] %s19
      %25 = dma.hbm_to_vmem [thread:$0]  %s1, 1024, %s20, [#allocation3], 64, 64, 4
    $region9: #{poswise_ffn.1} parent=1 // pred_fallthru
      _
    // Predicated region
    $region10: #{poswise_ffn.1} parent=1 // pred_check
      _
    $region11: #{poswise_ffn.1} parent=1 // pred_check_branch
      %27 = sbr.rel (0) target = $region13
    $region12: #{poswise_ffn.1} parent=1 // pred_region
      _
    $region13: #{poswise_ffn.1} parent=1 // pred_fallthru
      _
    // Predicated region
    $region14: #{poswise_ffn.1} parent=1 // pred_check
      _
    $region15: #{poswise_ffn.1} parent=1 // pred_check_branch
      %29 = sbr.rel (0) target = $region17
    $region16: #{poswise_ffn.1} parent=1 // pred_region
      %s31 = ssub.s32 1024, 1024
      %32 = vsyncadd [#allocation5], %s31
      %s33 = sshll.u32 [#allocation4], 4
      %s34 = int_to_ptr.vmem [resolvable:$true] %s33
      %39 = dma.hbm_to_vmem [thread:$0]  %s3, 1024, %s34, [#allocation5], 64, 64, 4
    $region17: #{poswise_ffn.1} parent=1 // pred_fallthru
      _
    // Predicated region
    $region18: #{poswise_ffn.1} parent=1 // pred_check
      _
    $region19: #{poswise_ffn.1} parent=1 // pred_check_branch
      %41 = sbr.rel (0) target = $region21
    $region20: #{poswise_ffn.1} parent=1 // pred_region
      _
    $region21: #{poswise_ffn.1} parent=1 // pred_fallthru
      _
    // Predicated region
    $region22: #{poswise_ffn.1} parent=1 // pred_check
      _
    $region23: #{poswise_ffn.1} parent=1 // pred_check_branch
      %43 = sbr.rel (0) target = $region25
    $region24: #{poswise_ffn.1} parent=1 // pred_region
      %44 = dma.done [#allocation3], 1024
    $region25: #{poswise_ffn.1} parent=1 // pred_fallthru
      _
    // Predicated region
    $region26: #{poswise_ffn.1} parent=1 // pred_check
      _
    $region27: #{poswise_ffn.1} parent=1 // pred_check_branch
      %46 = sbr.rel (0) target = $region29
    $region28: #{poswise_ffn.1} parent=1 // pred_region
      %47 = dma.done [#allocation5], 1024
    $region29: #{poswise_ffn.1} parent=1 // pred_fallthru
      _
    %v49 = vld [vmem:[%s0] sm:$0xf]
    %v50 = vld [vmem:[%s0 + $0x4] sm:$0xf]
    %v51 = vld [vmem:[#allocation2] sm:$0xf]
    %v52 = vld [vmem:[#allocation2 + $0x4] sm:$0xf]
    %v53 = vld [vmem:[#allocation2 + $0x8] sm:$0xf]
    %v54 = vld [vmem:[#allocation2 + $0xc] sm:$0xf]
    %v55 = vld [vmem:[#allocation2 + $0x10] sm:$0xf]
    %v56 = vld [vmem:[#allocation2 + $0x14] sm:$0xf]
    %v57 = vld [vmem:[#allocation2 + $0x18] sm:$0xf]
    %v58 = vld [vmem:[#allocation2 + $0x1c] sm:$0xf]
    %v59 = vld [vmem:[#allocation2 + $0x20] sm:$0xf]
    %v60 = vld [vmem:[#allocation2 + $0x24] sm:$0xf]
    %v61 = vld [vmem:[#allocation2 + $0x28] sm:$0xf]
    %v62 = vld [vmem:[#allocation2 + $0x2c] sm:$0xf]
    %v63 = vld [vmem:[#allocation2 + $0x30] sm:$0xf]
    %v64 = vld [vmem:[#allocation2 + $0x34] sm:$0xf]
    %v65 = vld [vmem:[#allocation2 + $0x38] sm:$0xf]
    %v66 = vld [vmem:[#allocation2 + $0x3c] sm:$0xf]
    %v67 = vld [vmem:[%s2] sm:$0x1]
    %v69 = vlaneseq
    %v70 = vshrl.u32 %v69, 7
    %v71 = vsub.s32 0, %v70
    %v72 = vrot.slane %v67, %v71
    %v76 = vunpack.c.l.b16 %v49
    %v77 = vunpack.c.l.b16 %v50
    %v78 = vpack.c.b16 %v77, %v76
    %v96 = vunpack.c.l.b16 %v51
    %v97 = vunpack.c.l.b16 %v52
    %v98 = vunpack.c.l.b16 %v53
    %v99 = vunpack.c.l.b16 %v54
    %v100 = vunpack.c.l.b16 %v55
    %v101 = vunpack.c.l.b16 %v56
    %v102 = vunpack.c.l.b16 %v57
    %v103 = vunpack.c.l.b16 %v58
    %v104 = vunpack.c.l.b16 %v59
    %v105 = vunpack.c.l.b16 %v60
    %v106 = vunpack.c.l.b16 %v61
    %v107 = vunpack.c.l.b16 %v62
    %v108 = vunpack.c.l.b16 %v63
    %v109 = vunpack.c.l.b16 %v64
    %v110 = vunpack.c.l.b16 %v65
    %v111 = vunpack.c.l.b16 %v66
    %v112 = vpack.c.b16 %v97, %v96
    %v113 = vpack.c.b16 %v99, %v98
    %v114 = vpack.c.b16 %v101, %v100
    %v115 = vpack.c.b16 %v103, %v102
    %v116 = vpack.c.b16 %v105, %v104
    %v117 = vpack.c.b16 %v107, %v106
    %v118 = vpack.c.b16 %v109, %v108
    %v119 = vpack.c.b16 %v111, %v110
    %128 = vmatprep.subr.bf16.mxu0 0
    %129 = vmatpush1.bf16.msra.mxu0 %v119
    %130 = vmatprep.subr.bf16.mxu0 0
    %131 = vmatpush1.bf16.msra.mxu0 %v118
    %132 = vmatprep.subr.bf16.mxu0 0
    %133 = vmatpush1.bf16.msra.mxu0 %v117
    %134 = vmatprep.subr.bf16.mxu0 0
    %135 = vmatpush1.bf16.msra.mxu0 %v116
    %136 = vmatprep.subr.bf16.mxu0 0
    %137 = vmatpush1.bf16.msra.mxu0 %v115
    %138 = vmatprep.subr.bf16.mxu0 0
    %139 = vmatpush1.bf16.msra.mxu0 %v114
    %140 = vmatprep.subr.bf16.mxu0 0
    %141 = vmatpush1.bf16.msra.mxu0 %v113
    %142 = vmatprep.subr.bf16.mxu0 0
    %143 = vmatpush1.bf16.msra.mxu0 %v112
    %144 = vmatprep.subr.bf16.mxu0 0
    %145 = vmatpush2.bf16.msra.mxu0 0
    %146 = vmatprep.subr.bf16.mxu0 0
    %147 = vmatpush2.bf16.msra.mxu0 0
    %148 = vmatprep.subr.bf16.mxu0 0
    %149 = vmatpush2.bf16.msra.mxu0 0
    %150 = vmatprep.subr.bf16.mxu0 0
    %151 = vmatpush2.bf16.msra.mxu0 0
    %152 = vmatprep.subr.bf16.mxu0 0
    %153 = vmatpush2.bf16.msra.mxu0 0
    %154 = vmatprep.subr.bf16.mxu0 0
    %155 = vmatpush2.bf16.msra.mxu0 0
    %156 = vmatprep.subr.bf16.mxu0 0
    %157 = vmatpush2.bf16.msra.mxu0 0
    %158 = vmatprep.subr.bf16.mxu0 0
    %159 = vmatpush2.bf16.msra.mxu0 0
    %160 = vmatprep.mubr.bf16.mxu0 0
    %161 = vmatmul.mubr.bf16.gmra.mxu0 %v78
    %v162 = vpop.f32.mrf.mxu0
    %v163 = vadd.f32 %v72, %v162
    %v164 = vpop.f32.mrf.mxu0
    %v165 = vpop.f32.mrf.mxu0
    %v166 = vadd.f32 %v72, %v165
    %v167 = vpop.f32.mrf.mxu0
    %168 = vdwg.mxu0
    %v169 = vmax.f32 %v163, 0.0
    %v170 = vmax.f32 %v166, 0.0
    %v171 = vpack.c.bf16 %v170, %v169
    %v172 = vld [vmem:[#allocation4] sm:$0xf]
    %v173 = vld [vmem:[#allocation4 + $0x4] sm:$0xf]
    %v174 = vld [vmem:[#allocation4 + $0x8] sm:$0xf]
    %v175 = vld [vmem:[#allocation4 + $0xc] sm:$0xf]
    %v176 = vld [vmem:[#allocation4 + $0x10] sm:$0xf]
    %v177 = vld [vmem:[#allocation4 + $0x14] sm:$0xf]
    %v178 = vld [vmem:[#allocation4 + $0x18] sm:$0xf]
    %v179 = vld [vmem:[#allocation4 + $0x1c] sm:$0xf]
    %v180 = vld [vmem:[#allocation4 + $0x20] sm:$0xf]
    %v181 = vld [vmem:[#allocation4 + $0x24] sm:$0xf]
    %v182 = vld [vmem:[#allocation4 + $0x28] sm:$0xf]
    %v183 = vld [vmem:[#allocation4 + $0x2c] sm:$0xf]
    %v184 = vld [vmem:[#allocation4 + $0x30] sm:$0xf]
    %v185 = vld [vmem:[#allocation4 + $0x34] sm:$0xf]
    %v186 = vld [vmem:[#allocation4 + $0x38] sm:$0xf]
    %v187 = vld [vmem:[#allocation4 + $0x3c] sm:$0xf]
    %v188 = vld [vmem:[%s4] sm:$0x1]
    %v190 = vlaneseq
    %v191 = vshrl.u32 %v190, 7
    %v192 = vsub.s32 0, %v191
    %v193 = vrot.slane %v188, %v192
    %v211 = vunpack.c.l.b16 %v172
    %v212 = vunpack.c.l.b16 %v173
    %v213 = vunpack.c.l.b16 %v174
    %v214 = vunpack.c.l.b16 %v175
    %v215 = vunpack.c.l.b16 %v176
    %v216 = vunpack.c.l.b16 %v177
    %v217 = vunpack.c.l.b16 %v178
    %v218 = vunpack.c.l.b16 %v179
    %v219 = vunpack.c.l.b16 %v180
    %v220 = vunpack.c.l.b16 %v181
    %v221 = vunpack.c.l.b16 %v182
    %v222 = vunpack.c.l.b16 %v183
    %v223 = vunpack.c.l.b16 %v184
    %v224 = vunpack.c.l.b16 %v185
    %v225 = vunpack.c.l.b16 %v186
    %v226 = vunpack.c.l.b16 %v187
    %v227 = vpack.c.b16 %v212, %v211
    %v228 = vpack.c.b16 %v214, %v213
    %v229 = vpack.c.b16 %v216, %v215
    %v230 = vpack.c.b16 %v218, %v217
    %v231 = vpack.c.b16 %v220, %v219
    %v232 = vpack.c.b16 %v222, %v221
    %v233 = vpack.c.b16 %v224, %v223
    %v234 = vpack.c.b16 %v226, %v225
    %243 = vmatprep.subr.bf16.mxu0 0
    %244 = vmatpush1.bf16.msra.mxu0 %v234
    %245 = vmatprep.subr.bf16.mxu0 0
    %246 = vmatpush1.bf16.msra.mxu0 %v233
    %247 = vmatprep.subr.bf16.mxu0 0
    %248 = vmatpush1.bf16.msra.mxu0 %v232
    %249 = vmatprep.subr.bf16.mxu0 0
    %250 = vmatpush1.bf16.msra.mxu0 %v231
    %251 = vmatprep.subr.bf16.mxu0 0
    %252 = vmatpush1.bf16.msra.mxu0 %v230
    %253 = vmatprep.subr.bf16.mxu0 0
    %254 = vmatpush1.bf16.msra.mxu0 %v229
    %255 = vmatprep.subr.bf16.mxu0 0
    %256 = vmatpush1.bf16.msra.mxu0 %v228
    %257 = vmatprep.subr.bf16.mxu0 0
    %258 = vmatpush1.bf16.msra.mxu0 %v227
    %259 = vmatprep.subr.bf16.mxu0 0
    %260 = vmatpush2.bf16.msra.mxu0 0
    %261 = vmatprep.subr.bf16.mxu0 0
    %262 = vmatpush2.bf16.msra.mxu0 0
    %263 = vmatprep.subr.bf16.mxu0 0
    %264 = vmatpush2.bf16.msra.mxu0 0
    %265 = vmatprep.subr.bf16.mxu0 0
    %266 = vmatpush2.bf16.msra.mxu0 0
    %267 = vmatprep.subr.bf16.mxu0 0
    %268 = vmatpush2.bf16.msra.mxu0 0
    %269 = vmatprep.subr.bf16.mxu0 0
    %270 = vmatpush2.bf16.msra.mxu0 0
    %271 = vmatprep.subr.bf16.mxu0 0
    %272 = vmatpush2.bf16.msra.mxu0 0
    %273 = vmatprep.subr.bf16.mxu0 0
    %274 = vmatpush2.bf16.msra.mxu0 0
    %275 = vmatprep.mubr.bf16.mxu0 0
    %276 = vmatmul.mubr.bf16.gmra.mxu0 %v171
    %v277 = vpop.f32.mrf.mxu0
    %v278 = vadd.f32 %v193, %v277
    %v279 = vpop.f32.mrf.mxu0
    %v280 = vpop.f32.mrf.mxu0
    %v281 = vadd.f32 %v193, %v280
    %v282 = vpop.f32.mrf.mxu0
    %283 = vdwg.mxu0
    %284 = vst [vmem:[%s5] sm:$0xff] %v278
    %285 = vst [vmem:[%s5 + $0x8] sm:$0xff] %v281
    // Predicated region
    $region30: #{poswise_ffn.1} parent=1 // pred_check
      _
    $region31: #{poswise_ffn.1} parent=1 // pred_check_branch
      %287 = sbr.rel (0) target = $region33
    $region32: #{poswise_ffn.1} parent=1 // pred_region
      _
    $region33: #{poswise_ffn.1} parent=1 // pred_fallthru
      _
    // Predicated region
    $region34: #{poswise_ffn.1} parent=1 // pred_check
      _
    $region35: #{poswise_ffn.1} parent=1 // pred_check_branch
      %289 = sbr.rel (0) target = $region37
    $region36: #{poswise_ffn.1} parent=1 // pred_region
      _
    $region37: #{poswise_ffn.1} parent=1 // pred_fallthru
      _
    %290 = vsyncpa [#allocation3], 1
    %291 = vsyncpa [#allocation5], 1

</llo_original>
